<compile_context>
chip_gen: v7x
topology: tpu7x:2x2x1
jax: 0.10.0
libtpu: 0.0.40
codegen_flags: <defaults>
</compile_context>

<pallas_src>
import functools

import jax
import jax.numpy as jnp
from jax.experimental import pallas as pl
from jax.experimental.pallas import tpu as pltpu


def _round_up(x: int, m: int) -> int:
    return ((x + m - 1) // m) * m


def _vmem_capacity_bytes() -> int:
    """Physical VMEM per TensorCore; conservative (v7x = 64 MiB) fallback."""
    try:
        return int(pltpu.get_tpu_info().vmem_capacity_bytes)
    except Exception:
        return 64 * 1024 * 1024


# ---------------------------------------------------------------------------
# Fast path: whole (V, D) table resident in VMEM (single-buffered); each
# (T, D) output tile is produced as a one-hot x table matmul on the MXU.
# ---------------------------------------------------------------------------
def _embed_onehot_kernel(ids_ref, table_ref, out_ref):
    # ids_ref:   (1, T) int32, lane-dense token ids for this tile.
    # table_ref: (V, D) full embedding table, resident in VMEM (constant
    #            index_map + Buffered(1) -> one copy, DMA'd from HBM once).
    # out_ref:   (T, D) dense output tile.
    T = out_ref.shape[0]
    V = table_ref.shape[0]
    ids_col = jnp.transpose(ids_ref[...], (1, 0))                 # (T, 1)
    vocab_iota = jax.lax.broadcasted_iota(jnp.int32, (T, V), 1)   # (T, V)
    onehot = (vocab_iota == ids_col).astype(table_ref.dtype)      # (T, V)
    # DEFAULT MXU precision: one-hot rows are exact in bf16, so the selected
    # row matches the table entry to within bf16 rounding.
    # TODO(synk): a non-finite table entry (Inf/NaN) would pollute the whole
    # tile through 0*Inf on the MXU; switch to a dynamic row gather if needed.
    out_ref[...] = jnp.dot(
        onehot, table_ref[...], preferred_element_type=jnp.float32
    ).astype(out_ref.dtype)


def _token_embedding_resident(ids_pad, table, *, tile_tokens, vmem_limit):
    N_pad = ids_pad.shape[0]
    V, D = table.shape
    T = tile_tokens
    ids_row = ids_pad.reshape(1, N_pad)
    grid = (N_pad // T,)

    return pl.pallas_call(
        _embed_onehot_kernel,
        out_shape=jax.ShapeDtypeStruct((N_pad, D), table.dtype),
        grid=grid,
        in_specs=[
            # Lane-dense (1, T) id block per grid step (no 1 -> 128 lane pad).
            pl.BlockSpec((1, T), lambda i: (0, i)),
            # Whole table, same block every step, single-buffered -> resident.
            pl.BlockSpec((V, D), lambda i: (0, 0),
                         pipeline_mode=pl.Buffered(1)),
        ],
        out_specs=pl.BlockSpec((T, D), lambda i: (i, 0)),
        compiler_params=pltpu.CompilerParams(
            dimension_semantics=("parallel",),   # independent tiles: megacore OK
            vmem_limit_bytes=vmem_limit,
        ),
    )(ids_row, table)


# ---------------------------------------------------------------------------
# Fallback path (table too large for VMEM): batched manual row-DMA gather.
# Table stays in HBM; ids live in SMEM (scalar prefetch); each grid step DMAs
# its T rows straight into the (T, D) output block.
# ---------------------------------------------------------------------------
def _embed_dma_gather_kernel(ids_ref, table_hbm_ref, out_ref, copy_sem):
    # ids_ref:       (N_pad,) int32 in SMEM (scalar prefetch).
    # table_hbm_ref: (V, D) embedding table left in HBM (memory_space=ANY).
    # out_ref:       (T, D) VMEM output tile; row DMAs land directly in it.
    # copy_sem:      (1,) DMA semaphore shared by this tile's row copies.
    i = pl.program_id(0)
    T = out_ref.shape[0]

    @pl.loop(0, T)
    def _issue(t):
        row = ids_ref[i * T + t]
        pltpu.make_async_copy(
            table_hbm_ref.at[pl.ds(row, 1), :],
            out_ref.at[pl.ds(t, 1), :],
            copy_sem.at[0],
        ).start()

    @pl.loop(0, T)
    def _drain(t):
        # Same-shaped descriptor; .wait() only needs the semaphore + size.
        pltpu.make_async_copy(
            table_hbm_ref.at[pl.ds(0, 1), :],
            out_ref.at[pl.ds(t, 1), :],
            copy_sem.at[0],
        ).wait()


def _token_embedding_dma_gather(ids_pad, table, *, tile_tokens, vmem_limit):
    N_pad = ids_pad.shape[0]
    V, D = table.shape
    T = tile_tokens
    grid = (N_pad // T,)

    return pl.pallas_call(
        _embed_dma_gather_kernel,
        out_shape=jax.ShapeDtypeStruct((N_pad, D), table.dtype),
        grid_spec=pltpu.PrefetchScalarGridSpec(
            num_scalar_prefetch=1,                          # ids -> SMEM
            grid=grid,
            in_specs=[pl.BlockSpec(memory_space=pl.ANY)],   # table stays in HBM
            out_specs=pl.BlockSpec((T, D), lambda i, ids: (i, 0)),
            scratch_shapes=[pltpu.SemaphoreType.DMA((1,))],
        ),
        compiler_params=pltpu.CompilerParams(
            dimension_semantics=("parallel",),  # self-contained tiles: megacore OK
            vmem_limit_bytes=vmem_limit,
        ),
    )(ids_pad, table)


# ---------------------------------------------------------------------------
# Public wrapper == TokenEmbedding.forward (dropout p=0.0 -> identity).
# ---------------------------------------------------------------------------
@functools.partial(jax.jit, static_argnames=("dropout_p", "tile_tokens", "path"))
def token_embedding(x, table, dropout_p: float = 0.0, tile_tokens=None,
                    path: str = "auto"):
    """Pallas TokenEmbedding forward.

    x: integer token ids (any shape); table: (V, D) embedding weight.
    Returns embeddings of shape x.shape + (D,).
    path: "auto" | "resident" | "dma" (forcing a path is mainly for testing).
    """
    assert dropout_p == 0.0
    # TODO(synk): for dropout_p > 0 (training) add pltpu.prng_seed +
    # pltpu.stateful_bernoulli masking and 1/(1-p) scaling inside the kernels.
    V, D = table.shape
    itemsize = jnp.dtype(table.dtype).itemsize

    # Flatten and clamp ids so out-of-range tokens can never drive an
    # out-of-bounds table access (torch's nn.Embedding would raise).
    ids = jnp.clip(x.reshape(-1).astype(jnp.int32), 0, V - 1)
    N = ids.shape[0]

    # ---- tile size: MXU-M aligned (256, also a multiple of v5e's 128);
    #      raised for small D so per-grid-step overhead stays amortized. ----
    if tile_tokens is None:
        tile_tokens = 512 if D <= 512 else 256
    t_req = max(8, int(tile_tokens))
    if N <= t_req:
        T = _round_up(N, 8)            # single tile covers everything
    else:
        T = _round_up(t_req, 256)
    N_pad = _round_up(N, T)
    if N_pad != N:
        ids = jnp.pad(ids, (0, N_pad - N))   # pad with id 0 (valid row)

    # ---- generation-aware VMEM budgeting ----
    capacity = _vmem_capacity_bytes()
    resident_need = (
        V * D * itemsize                     # resident table (single-buffered)
        + 2 * T * D * itemsize               # double-buffered output tiles
        + T * D * 4                          # f32 matmul result before cast
        + T * V * (4 + itemsize + 1)         # iota + one-hot + mask intermediates
        + 2 * 8 * T * 4                      # (1, T) id tiles (sublane-padded)
        + (2 << 20)                          # headroom
    )
    resident_budget = capacity - (16 << 20)

    if path == "resident":
        use_resident = True
    elif path == "dma":
        use_resident = False
    else:
        use_resident = resident_need <= resident_budget

    if use_resident:
        vmem_limit = int(min(capacity - (2 << 20),
                             max(resident_need + (8 << 20), 32 << 20)))
        out = _token_embedding_resident(ids, table, tile_tokens=T,
                                        vmem_limit=vmem_limit)
    else:
        gather_need = 2 * T * D * itemsize + (2 << 20)
        vmem_limit = int(min(capacity - (2 << 20),
                             max(gather_need + (8 << 20), 32 << 20)))
        out = _token_embedding_dma_gather(ids, table, tile_tokens=T,
                                          vmem_limit=vmem_limit)

    return out[:N].reshape(x.shape + (D,))


if __name__ == "__main__":
    key = jax.random.PRNGKey(0)
    k_w, k_x = jax.random.split(key)

    vocab_size, dim_model = 32, 128
    B, S = 2, 8

    # nn.Embedding default init: weight ~ N(0, 1)
    table = jax.random.normal(k_w, (vocab_size, dim_model), dtype=jnp.float32)
    x = jax.random.randint(k_x, (B, S), 0, vocab_size, dtype=jnp.int32)

    # Reference: plain JAX gather (== word_embeddings(x) with p=0 dropout).
    ref = table[x]

    # Auto path (small table -> VMEM-resident one-hot gather).
    y = jax.block_until_ready(token_embedding(x, table, dropout_p=0.0))
    assert y.shape == (B, S, dim_model), y.shape
    assert y.dtype == table.dtype
    # DEFAULT-precision one-hot matmul is within bf16 rounding of the true
    # gather; wrong-row gathers would differ by O(1).
    assert jnp.allclose(y, ref, atol=1e-2, rtol=1e-2), "resident path mismatch"

    # Large-vocab fallback (batched manual row-DMA gather), forced for coverage.
    y_dma = jax.block_until_ready(
        token_embedding(x, table, dropout_p=0.0, path="dma"))
    assert y_dma.shape == (B, S, dim_model)
    assert jnp.array_equal(y_dma, ref), "dma gather path mismatch"

    print("KERNEL_OK")
</pallas_src>

<mosaic_0001>
module attributes {stable_mosaic.version = 11 : i64} {
  func.func @_embed_onehot_kernel(%arg0: i32, %arg1: memref<1x16xi32, #tpu.memory_space<vmem>>, %arg2: memref<32x128xf32, #tpu.memory_space<vmem>>, %arg3: memref<16x128xf32, #tpu.memory_space<vmem>>) attributes {dimension_semantics = [#tpu.dimension_semantics<parallel>], iteration_bounds = array<i64: 1>, scalar_prefetch = 0 : i64, scratch_operands = 0 : i64, tpu.core_type = #tpu.core_type<tc>, window_params = [{transform_indices = @transform_0, window_bounds = array<i64: 1, 16>}, {pipeline_mode = #tpu.pipeline_mode<synchronous>, transform_indices = @transform_1, window_bounds = array<i64: 32, 128>}, {transform_indices = @transform_2, window_bounds = array<i64: 16, 128>}]} {
    %c0 = arith.constant 0 : index
    %c0_0 = arith.constant 0 : index
    %0 = vector.load %arg1[%c0, %c0_0] : memref<1x16xi32, #tpu.memory_space<vmem>>, vector<1x16xi32>
    %1 = tpu.transpose %0, [1, 0] : vector<1x16xi32> -> vector<16x1xi32>
    %2 = tpu.iota {dimensions = array<i32: 1>} : vector<16x32xi32>
    %3 = vector.broadcast %1 : vector<16x1xi32> to vector<16x32xi32>
    %4 = arith.cmpi eq, %2, %3 : vector<16x32xi32>
    %5 = arith.extui %4 : vector<16x32xi1> to vector<16x32xi32>
    %6 = arith.sitofp %5 : vector<16x32xi32> to vector<16x32xf32>
    %c0_1 = arith.constant 0 : index
    %c0_2 = arith.constant 0 : index
    %7 = vector.load %arg2[%c0_1, %c0_2] : memref<32x128xf32, #tpu.memory_space<vmem>>, vector<32x128xf32>
    %cst = arith.constant dense<0.000000e+00> : vector<16x128xf32>
    %8 = tpu.matmul %6, %7, %cst {dimension_numbers = #tpu.dot_dimension_numbers<[1], [0], [0], [1], [0, 0, 1, 1], [], []>} : vector<16x32xf32>, vector<32x128xf32>, vector<16x128xf32> -> vector<16x128xf32>
    %c0_3 = arith.constant 0 : index
    %c0_4 = arith.constant 0 : index
    %9 = vector.load %arg3[%c0_3, %c0_4] : memref<16x128xf32, #tpu.memory_space<vmem>>, vector<16x128xf32>
    tpu.vector_store %arg3[%c0_3, %c0_4], %8 {strides = array<i32>} : memref<16x128xf32, #tpu.memory_space<vmem>>, vector<16x128xf32>,
    return
  }
  func.func @transform_0(%arg0: i32) -> (i32, i32) {
    %c0_i32 = arith.constant 0 : i32
    %c0_i32_0 = arith.constant 0 : i32
    return %c0_i32, %arg0 : i32, i32
  }
  func.func @transform_1(%arg0: i32) -> (i32, i32) {
    %c0_i32 = arith.constant 0 : i32
    %c0_i32_0 = arith.constant 0 : i32
    %c0_i32_1 = arith.constant 0 : i32
    return %c0_i32, %c0_i32_0 : i32, i32
  }
  func.func @transform_2(%arg0: i32) -> (i32, i32) {
    %c0_i32 = arith.constant 0 : i32
    %c0_i32_0 = arith.constant 0 : i32
    return %arg0, %c0_i32 : i32, i32
  }
}

</mosaic_0001>

<llo_original>
// kernel: token_embedding.1
$region0: #{token_embedding.1}
  #allocation0 [shape = 'u32[]', space=smem, size = 0x4, offset = 0x4, fixed_abs, tag = 'smem constant byte address 0x4 - core index']
  #allocation1 [shape = 'u32[144,128]{1,0:T(1,128)}', space=vmem, size = 0x12000, scoped, tag = 'internal scratch']
  %s0 = inlined_call_operand.vmem [shape: s32[1,16], index: 0, kind: input, shape index: {}]
  %s1 = inlined_call_operand.hbm [shape: f32[32,128], index: 1, kind: input, shape index: {}]
  %s2 = inlined_call_operand.hbm [shape: f32[16,128], index: 2, kind: output, shape index: {}]
  %s3 = sld [smem:[#allocation0]]
  $region22: #{token_embedding.1} parent=0
    _
  %s5 = ssub.s32 1, %s3
  %s6 = scalar_select 0, %s5, %s3
  $region1: #{token_embedding.1} parent=0
    #allocation2 [shape = 'u8[16384]{0}', space=vmem, size = 0x4000, scoped, tag = 'input window, operand 1, single buffered']
    #allocation3 [shape = 's32[1]{0}', space=sflag, size = 0x4, scoped, tag = 'scoped memory for token_embedding.1']
    #allocation4 [shape = 's32[1]{0}', space=sflag, size = 0x4, scoped, tag = 'scoped memory for token_embedding.1']
    #allocation5 [shape = 'u8[8192]{0}', space=vmem, size = 0x2000, scoped, tag = 'output window, operand 0, single buffered']
    %7 = vsyncpa [#allocation3], 0
    %8 = vsyncpa [#allocation4], 0
    // Predicated region
    $region2: #{token_embedding.1} parent=1 // pred_check
      _
    $region3: #{token_embedding.1} parent=1 // pred_check_branch
      %10 = sbr.rel (0) target = $region5
    $region4: #{token_embedding.1} parent=1 // pred_region
      _
    $region5: #{token_embedding.1} parent=1 // pred_fallthru
      _
    // Predicated region
    $region6: #{token_embedding.1} parent=1 // pred_check
      _
    $region7: #{token_embedding.1} parent=1 // pred_check_branch
      %12 = sbr.rel (0) target = $region9
    $region8: #{token_embedding.1} parent=1 // pred_region
      %s14 = ssub.s32 512, 512
      %15 = vsyncadd [#allocation3], %s14
      %s16 = sshll.u32 [#allocation2], 4
      %s17 = int_to_ptr.vmem [resolvable:$true] %s16
      %22 = dma.hbm_to_vmem [thread:$0]  %s1, 512, %s17, [#allocation3], 128, 128, 8
    $region9: #{token_embedding.1} parent=1 // pred_fallthru
      _
    // Predicated region
    $region10: #{token_embedding.1} parent=1 // pred_check
      _
    $region11: #{token_embedding.1} parent=1 // pred_check_branch
      %24 = sbr.rel (0) target = $region13
    $region12: #{token_embedding.1} parent=1 // pred_region
      %25 = dma.done [#allocation3], 512
    $region13: #{token_embedding.1} parent=1 // pred_fallthru
      _
    %v26 = vld [vmem:[%s0] sm:$0x1]
    %27 = vxpose.xlu0.b32.start [1/16] %v26, 128
    %28 = vxpose.xlu0.b32.cont [2/16] 0, 128
    %29 = vxpose.xlu0.b32.cont [3/16] 0, 128
    %30 = vxpose.xlu0.b32.cont [4/16] 0, 128
    %31 = vxpose.xlu0.b32.cont [5/16] 0, 128
    %32 = vxpose.xlu0.b32.cont [6/16] 0, 128
    %33 = vxpose.xlu0.b32.cont [7/16] 0, 128
    %34 = vxpose.xlu0.b32.cont [8/16] 0, 128
    %35 = vxpose.xlu0.b32.cont [9/16] 0, 128
    %36 = vxpose.xlu0.b32.cont [10/16] 0, 128
    %37 = vxpose.xlu0.b32.cont [11/16] 0, 128
    %38 = vxpose.xlu0.b32.cont [12/16] 0, 128
    %39 = vxpose.xlu0.b32.cont [13/16] 0, 128
    %40 = vxpose.xlu0.b32.cont [14/16] 0, 128
    %41 = vxpose.xlu0.b32.cont [15/16] 0, 128
    %42 = vxpose.xlu0.b32.end [16/16] 0, 128
    %v43 = vpop.trf.xlu0
    %v44 = vpop.trf.xlu0
    %v45 = vpop.trf.xlu0
    %v46 = vpop.trf.xlu0
    %v47 = vpop.trf.xlu0
    %v48 = vpop.trf.xlu0
    %v49 = vpop.trf.xlu0
    %v50 = vpop.trf.xlu0
    %v51 = vpop.trf.xlu0
    %v52 = vpop.trf.xlu0
    %v53 = vpop.trf.xlu0
    %v54 = vpop.trf.xlu0
    %v55 = vpop.trf.xlu0
    %v56 = vpop.trf.xlu0
    %v57 = vpop.trf.xlu0
    %v58 = vpop.trf.xlu0
    %v59 = vlaneseq
    %v60 = vand.u32 %v59, 127
    %61 = vset.pattern.permute.xlu0 0
    %62 = vperm.xlu0 %61, %v43
    %v63 = vpop.permute.xlu0 %62
    %64 = vset.pattern.permute.xlu0 0
    %65 = vperm.xlu0 %64, %v44
    %v66 = vpop.permute.xlu0 %65
    %vm67 = vcmp.eq.s32.totalorder %v60, %v63
    %vm68 = vcmp.eq.s32.totalorder %v60, %v66
    %v69 = vsel %vm67, 1, 0
    %v70 = vsel %vm68, 1, 0
    %v71 = vcvt.s32.f32 %v69
    %v72 = vcvt.s32.f32 %v70
    %v73 = vld [vmem:[#allocation2] sm:$0xff]
    %v74 = vld [vmem:[#allocation2 + $0x8] sm:$0xff]
    %v75 = vld [vmem:[#allocation2 + $0x10] sm:$0xff]
    %v76 = vld [vmem:[#allocation2 + $0x18] sm:$0xff]
    %vm77 = vcmask 261120
    %v79 = vsel %vm77, %v71, 0
    %v82 = vsel %vm77, %v72, 0
    %84 = vmatprep.subr.mxu0 0.0
    %85 = vmatpush1.msra.mxu0 %v73
    %86 = vmatprep.subr.mxu0 0.0
    %87 = vmatpush1.msra.mxu0 %v74
    %88 = vmatprep.subr.mxu0 0.0
    %89 = vmatpush1.msra.mxu0 %v75
    %90 = vmatprep.subr.mxu0 0.0
    %91 = vmatpush1.msra.mxu0 %v76
    %92 = vmatprep.subr.mxu0 0.0
    %93 = vmatpush1.msra.mxu0 0.0
    %94 = vmatprep.subr.mxu0 0.0
    %95 = vmatpush1.msra.mxu0 0.0
    %96 = vmatprep.subr.mxu0 0.0
    %97 = vmatpush1.msra.mxu0 0.0
    %98 = vmatprep.subr.mxu0 0.0
    %99 = vmatpush1.msra.mxu0 0.0
    %100 = vmatprep.subr.mxu0 0.0
    %101 = vmatpush1.msra.mxu0 0.0
    %102 = vmatprep.subr.mxu0 0.0
    %103 = vmatpush1.msra.mxu0 0.0
    %104 = vmatprep.subr.mxu0 0.0
    %105 = vmatpush1.msra.mxu0 0.0
    %106 = vmatprep.subr.mxu0 0.0
    %107 = vmatpush1.msra.mxu0 0.0
    %108 = vmatprep.subr.mxu0 0.0
    %109 = vmatpush1.msra.mxu0 0.0
    %110 = vmatprep.subr.mxu0 0.0
    %111 = vmatpush1.msra.mxu0 0.0
    %112 = vmatprep.subr.mxu0 0.0
    %113 = vmatpush1.msra.mxu0 0.0
    %114 = vmatprep.subr.mxu0 0.0
    %115 = vmatpush1.msra.mxu0 0.0
    %116 = vmatprep.subr.mxu0 0.0
    %117 = vmatpush1.msra.mxu0 0.0
    %118 = vmatprep.subr.mxu0 0.0
    %119 = vmatpush1.msra.mxu0 0.0
    %120 = vmatprep.subr.mxu0 0.0
    %121 = vmatpush1.msra.mxu0 0.0
    %122 = vmatprep.subr.mxu0 0.0
    %123 = vmatpush1.msra.mxu0 0.0
    %124 = vmatprep.subr.mxu0 0.0
    %125 = vmatpush1.msra.mxu0 0.0
    %126 = vmatprep.subr.mxu0 0.0
    %127 = vmatpush1.msra.mxu0 0.0
    %128 = vmatprep.subr.mxu0 0.0
    %129 = vmatpush1.msra.mxu0 0.0
    %130 = vmatprep.subr.mxu0 0.0
    %131 = vmatpush1.msra.mxu0 0.0
    %132 = vmatprep.subr.mxu0 0.0
    %133 = vmatpush1.msra.mxu0 0.0
    %134 = vmatprep.subr.mxu0 0.0
    %135 = vmatpush1.msra.mxu0 0.0
    %136 = vmatprep.subr.mxu0 0.0
    %137 = vmatpush1.msra.mxu0 0.0
    %138 = vmatprep.subr.mxu0 0.0
    %139 = vmatpush1.msra.mxu0 0.0
    %140 = vmatprep.subr.mxu0 0.0
    %141 = vmatpush1.msra.mxu0 0.0
    %142 = vmatprep.subr.mxu0 0.0
    %143 = vmatpush1.msra.mxu0 0.0
    %144 = vmatprep.subr.mxu0 0.0
    %145 = vmatpush1.msra.mxu0 0.0
    %146 = vmatprep.subr.mxu0 0.0
    %147 = vmatpush1.msra.mxu0 0.0
    %148 = vmatprep.mubr.f32.mxu0 0.0
    %149 = vmatmul.mubr.f32.gmra.mrb[0].mxu0 %v79
    %v150 = vpop.f32.mrb[0].mxu0
    %v151 = vadd.f32 0.0, %v150
    %v152 = vpop.f32.mrb[0].mxu0
    %153 = vmatprep.mubr.f32.mxu0 0.0
    %154 = vmatmul.mubr.f32.gmra.mrb[0].mxu0 %v82
    %v155 = vpop.f32.mrb[0].mxu0
    %v156 = vadd.f32 0.0, %v155
    %v157 = vpop.f32.mrb[0].mxu0
    %158 = vdwg.mxu0
    %159 = vst [vmem:[#allocation5] sm:$0xff] %v151
    %160 = vst [vmem:[#allocation5 + $0x8] sm:$0xff] %v156
    // Predicated region
    $region14: #{token_embedding.1} parent=1 // pred_check
      _
    $region15: #{token_embedding.1} parent=1 // pred_check_branch
      %162 = sbr.rel (0) target = $region17
    $region16: #{token_embedding.1} parent=1 // pred_region
      %s164 = ssub.s32 256, 256
      %165 = vsyncadd [#allocation4], %s164
      %s166 = sshll.u32 [#allocation5], 4
      %s167 = int_to_ptr.vmem [resolvable:$true] %s166
      %172 = dma.vmem_to_hbm [thread:$0]  %s167, 256, %s2, [#allocation4], 128, 128, 8
    $region17: #{token_embedding.1} parent=1 // pred_fallthru
      _
    // Predicated region
    $region18: #{token_embedding.1} parent=1 // pred_check
      _
    $region19: #{token_embedding.1} parent=1 // pred_check_branch
      %174 = sbr.rel (0) target = $region21
    $region20: #{token_embedding.1} parent=1 // pred_region
      %175 = dma.done [#allocation4], 256
    $region21: #{token_embedding.1} parent=1 // pred_fallthru
      _
    %176 = vsyncpa [#allocation3], 1
    %177 = vsyncpa [#allocation4], 1

</llo_original>
